<compile_context>
chip_gen: v5e
topology: v5e:2x2
jax: 0.10.0
libtpu: 0.0.40
codegen_flags: <defaults>
</compile_context>

<pallas_src>
import functools

import jax
import jax.numpy as jnp
from jax.experimental import pallas as pl
from jax.experimental.pallas import tpu as pltpu

_EPS = 1e-5
_LANE = 128
_VMEM_LIMIT = 32 * 1024 * 1024  # safe on v5e/v6e/v7x; tiles here are tiny


# ------------------------------ small helpers ------------------------------ #

def _round_up(x, m):
    return ((x + m - 1) // m) * m


def _pick_tile_m(m, target=512):
    """Largest multiple-of-8 divisor of m that is <= min(target, m//2)."""
    cap = min(target, max(8, m // 2))
    t = (cap // 8) * 8
    while t >= 8:
        if m % t == 0:
            return t
        t -= 8
    return m  # fallback: single full block


def _pick_tile_ho(ho, wo, target_rows=512):
    """Row-tile for the direct 3x3 kernel: divides Ho, tile*Wo % 8 == 0."""
    t = min(ho, max(1, target_rows // max(wo, 1)))
    while t >= 1:
        if ho % t == 0 and (t * wo) % 8 == 0:
            return t
        t -= 1
    return None


def _pad_vec(v, cp):
    return jnp.pad(v, (0, cp - v.shape[0])).reshape(1, cp).astype(jnp.float32)


def _w_mat(w_oihw, cp):
    """OIHW -> (KH*KW*Cin, Cp) bf16, Cout zero-padded to Cp."""
    cout = w_oihw.shape[0]
    m = jnp.transpose(w_oihw, (2, 3, 1, 0)).reshape(-1, cout)
    return jnp.pad(m, ((0, 0), (0, cp - cout))).astype(jnp.bfloat16)


def _w_taps(w_oihw, cp):
    """OIHW -> (KH*KW, Cin, Cp) bf16 per-tap weights for the direct kernel."""
    cout, cin, kh, kw = w_oihw.shape
    t = jnp.transpose(w_oihw, (2, 3, 1, 0)).reshape(kh * kw, cin, cout)
    return jnp.pad(t, ((0, 0), (0, 0), (0, cp - cout))).astype(jnp.bfloat16)


def _im2col(x_nhwc, ksize, stride, pad):
    """(N,H,W,C) -> (N*Ho*Wo, k*k*C); K ordered (kh, kw, cin)."""
    n, h, w, c = x_nhwc.shape
    xp = jnp.pad(x_nhwc, ((0, 0), (pad, pad), (pad, pad), (0, 0)))
    ho = (h + 2 * pad - ksize) // stride + 1
    wo = (w + 2 * pad - ksize) // stride + 1
    cols = []
    for kh in range(ksize):
        for kw in range(ksize):
            patch = jax.lax.slice(
                xp, (0, kh, kw, 0),
                (n, kh + (ho - 1) * stride + 1, kw + (wo - 1) * stride + 1, c),
                (1, stride, stride, 1))
            cols.append(patch)
    return jnp.concatenate(cols, axis=-1).reshape(n * ho * wo, ksize * ksize * c)


# ----------------------------- Pallas kernels ------------------------------ #

def _matmul_stats_kernel(p_ref, w_ref, y_ref, sum_ref, sq_ref, acc_s, acc_q):
    """pass 1 (im2col / 1x1 path): y = P @ W  + per-channel sum / sumsq."""
    y = jnp.dot(p_ref[...], w_ref[...], preferred_element_type=jnp.float32)
    y_ref[...] = y

    @pl.when(pl.program_id(0) == 0)
    def _init():
        acc_s[...] = jnp.zeros_like(acc_s)
        acc_q[...] = jnp.zeros_like(acc_q)

    acc_s[...] += jnp.sum(y, axis=0, keepdims=True)
    acc_q[...] += jnp.sum(y * y, axis=0, keepdims=True)

    @pl.when(pl.program_id(0) == pl.num_programs(0) - 1)
    def _fin():
        sum_ref[...] = acc_s[...]
        sq_ref[...] = acc_q[...]


def _conv3x3_s1_stats_kernel(x_ref, w_ref, y_ref, sum_ref, sq_ref,
                             acc_s, acc_q, *, tile_ho, wo, cin):
    """pass 1 (direct stride-1 3x3): padded image is VMEM-resident; accumulate
    9 shifted matmuls (no im2col materialization)."""
    n = pl.program_id(0)
    t = pl.program_id(1)
    h0 = t * tile_ho
    cp = y_ref.shape[-1]

    y = jnp.zeros((tile_ho * wo, cp), jnp.float32)
    for kh in range(3):
        for kw in range(3):
            patch = x_ref[pl.ds(h0 + kh, tile_ho), pl.ds(kw, wo), :]
            patch = patch.reshape(tile_ho * wo, cin)
            y = y + jnp.dot(patch, w_ref[kh * 3 + kw],
                            preferred_element_type=jnp.float32)
    y_ref[...] = y

    @pl.when(jnp.logical_and(n == 0, t == 0))
    def _init():
        acc_s[...] = jnp.zeros_like(acc_s)
        acc_q[...] = jnp.zeros_like(acc_q)

    acc_s[...] += jnp.sum(y, axis=0, keepdims=True)
    acc_q[...] += jnp.sum(y * y, axis=0, keepdims=True)

    @pl.when(jnp.logical_and(n == pl.num_programs(0) - 1,
                             t == pl.num_programs(1) - 1))
    def _fin():
        sum_ref[...] = acc_s[...]
        sq_ref[...] = acc_q[...]


def _bn_finalize_kernel(*refs, inv_count, eps, apply_relu, has_residual,
                        emit_preact):
    """pass 2: normalize + affine (+ residual add) (+ ReLU) (+ preact)."""
    y_ref, sum_ref, sq_ref, g_ref, b_ref = refs[:5]
    idx = 5
    res_ref = None
    if has_residual:
        res_ref = refs[idx]
        idx += 1
    out_ref = refs[idx]
    idx += 1
    preact_ref = refs[idx] if emit_preact else None

    y = y_ref[...]
    mean = sum_ref[...] * inv_count
    var = jnp.maximum(sq_ref[...] * inv_count - mean * mean, 0.0)
    yhat = (y - mean) * jax.lax.rsqrt(var + eps) * g_ref[...] + b_ref[...]
    if has_residual:
        yhat = yhat + res_ref[...]
    if emit_preact:
        preact_ref[...] = yhat
    out_ref[...] = jnp.maximum(yhat, 0.0) if apply_relu else yhat


# ----------------------------- pallas_call glue ----------------------------- #

def matmul_bn_stats(patches, w_mat):
    """pass 1 for im2col / 1x1 convs. Returns y (M,Cp) f32, sum, sumsq (1,Cp)."""
    m, k = patches.shape
    cp = w_mat.shape[1]
    tm = _pick_tile_m(m)
    grid = (m // tm,)
    cost = pl.CostEstimate(
        flops=2 * m * k * cp, transcendentals=0,
        bytes_accessed=int(patches.size * 2 + w_mat.size * 2 + m * cp * 4))
    return pl.pallas_call(
        _matmul_stats_kernel,
        out_shape=(jax.ShapeDtypeStruct((m, cp), jnp.float32),
                   jax.ShapeDtypeStruct((1, cp), jnp.float32),
                   jax.ShapeDtypeStruct((1, cp), jnp.float32)),
        grid_spec=pltpu.PrefetchScalarGridSpec(
            num_scalar_prefetch=0,
            grid=grid,
            in_specs=[pl.BlockSpec((tm, k), lambda i: (i, 0)),
                      pl.BlockSpec((k, cp), lambda i: (0, 0))],
            out_specs=(pl.BlockSpec((tm, cp), lambda i: (i, 0)),
                       pl.BlockSpec((1, cp), lambda i: (0, 0)),
                       pl.BlockSpec((1, cp), lambda i: (0, 0))),
            scratch_shapes=[pltpu.VMEM((1, cp), jnp.float32),
                            pltpu.VMEM((1, cp), jnp.float32)]),
        compiler_params=pltpu.CompilerParams(
            dimension_semantics=("arbitrary",),
            vmem_limit_bytes=_VMEM_LIMIT),
        cost_estimate=cost,
    )(patches, w_mat)


def conv3x3_bn_stats_direct(x_nhwc, w_taps):
    """pass 1 for stride-1 3x3 convs without im2col.

    x_nhwc: (N,H,W,C) bf16 (unpadded); w_taps: (9, C, Cp) bf16.
    Returns y (M,Cp) f32 with M = N*H*W, plus per-channel sum / sumsq (1,Cp).
    """
    n, h, w, c = x_nhwc.shape
    ho, wo = h, w
    cp = w_taps.shape[-1]
    tile_ho = _pick_tile_ho(ho, wo)
    assert tile_ho is not None
    nht = ho // tile_ho
    m = n * ho * wo

    xp = jnp.pad(x_nhwc, ((0, 0), (1, 1), (1, 1), (0, 0)))
    hp, wp = h + 2, w + 2

    kernel = functools.partial(_conv3x3_s1_stats_kernel,
                               tile_ho=tile_ho, wo=wo, cin=c)
    cost = pl.CostEstimate(
        flops=2 * m * 9 * c * cp, transcendentals=0,
        bytes_accessed=int(n * hp * wp * c * 2 + 9 * c * cp * 2 + m * cp * 4))
    return pl.pallas_call(
        kernel,
        out_shape=(jax.ShapeDtypeStruct((m, cp), jnp.float32),
                   jax.ShapeDtypeStruct((1, cp), jnp.float32),
                   jax.ShapeDtypeStruct((1, cp), jnp.float32)),
        grid_spec=pltpu.PrefetchScalarGridSpec(
            num_scalar_prefetch=0,
            grid=(n, nht),
            in_specs=[
                # whole padded image resident in VMEM, re-DMA'd once per n
                pl.BlockSpec((None, hp, wp, c), lambda i, t: (i, 0, 0, 0)),
                pl.BlockSpec((9, c, cp), lambda i, t: (0, 0, 0)),
            ],
            out_specs=(
                pl.BlockSpec((tile_ho * wo, cp), lambda i, t: (i * nht + t, 0)),
                pl.BlockSpec((1, cp), lambda i, t: (0, 0)),
                pl.BlockSpec((1, cp), lambda i, t: (0, 0)),
            ),
            scratch_shapes=[pltpu.VMEM((1, cp), jnp.float32),
                            pltpu.VMEM((1, cp), jnp.float32)]),
        compiler_params=pltpu.CompilerParams(
            dimension_semantics=("arbitrary", "arbitrary"),
            vmem_limit_bytes=_VMEM_LIMIT),
        cost_estimate=cost,
    )(xp, w_taps)


def bn_finalize(y, ssum, ssq, gamma, beta, count, *, apply_relu,
                residual=None, emit_preact=False):
    """pass 2: BN normalize + affine (+ residual) (+ ReLU) (+ preact)."""
    m, cp = y.shape
    tm = _pick_tile_m(m)
    grid = (m // tm,)
    has_res = residual is not None

    in_specs = [pl.BlockSpec((tm, cp), lambda i: (i, 0)),
                pl.BlockSpec((1, cp), lambda i: (0, 0)),
                pl.BlockSpec((1, cp), lambda i: (0, 0)),
                pl.BlockSpec((1, cp), lambda i: (0, 0)),
                pl.BlockSpec((1, cp), lambda i: (0, 0))]
    args = [y, ssum, ssq, gamma, beta]
    if has_res:
        in_specs.append(pl.BlockSpec((tm, cp), lambda i: (i, 0)))
        args.append(residual)

    one = jax.ShapeDtypeStruct((m, cp), jnp.float32)
    out_spec = pl.BlockSpec((tm, cp), lambda i: (i, 0))
    if emit_preact:
        out_shape = (one, one)
        out_specs = (out_spec, pl.BlockSpec((tm, cp), lambda i: (i, 0)))
    else:
        out_shape = one
        out_specs = out_spec

    kernel = functools.partial(_bn_finalize_kernel,
                               inv_count=1.0 / float(count), eps=_EPS,
                               apply_relu=apply_relu, has_residual=has_res,
                               emit_preact=emit_preact)
    nio = 2 + (1 if has_res else 0) + (1 if emit_preact else 0)
    cost = pl.CostEstimate(flops=6 * m * cp, transcendentals=cp,
                           bytes_accessed=int(m * cp * 4 * nio + 4 * cp * 4))
    return pl.pallas_call(
        kernel,
        out_shape=out_shape,
        grid_spec=pltpu.PrefetchScalarGridSpec(
            num_scalar_prefetch=0, grid=grid,
            in_specs=in_specs, out_specs=out_specs),
        compiler_params=pltpu.CompilerParams(
            dimension_semantics=("parallel",),
            vmem_limit_bytes=_VMEM_LIMIT),
        cost_estimate=cost,
    )(*args)


def _conv3x3_s1(x_bf_nhwc, w_oihw, cp):
    """stride-1 3x3 conv: direct kernel if a legal row-tile exists, else im2col."""
    if _pick_tile_ho(x_bf_nhwc.shape[1], x_bf_nhwc.shape[2]) is not None:
        return conv3x3_bn_stats_direct(x_bf_nhwc, _w_taps(w_oihw, cp))
    p = _im2col(x_bf_nhwc, 3, 1, 1)
    return matmul_bn_stats(p, _w_mat(w_oihw, cp))


# ------------------------------- BasicBlock -------------------------------- #

class BasicBlockPallas:
    expansion = 1

    def __init__(self, in_planes, planes, stride=1, is_last=False, *, key):
        self.in_planes, self.planes = in_planes, planes
        self.stride, self.is_last = stride, is_last
        ks = jax.random.split(key, 9)

        def conv_w(k, cout, cin, ksz):
            bound = (1.0 / (cin * ksz * ksz)) ** 0.5
            return jax.random.uniform(k, (cout, cin, ksz, ksz), jnp.float32,
                                      -bound, bound)

        self.w1 = conv_w(ks[0], planes, in_planes, 3)
        self.g1 = 1.0 + 0.1 * jax.random.normal(ks[1], (planes,), jnp.float32)
        self.b1 = 0.1 * jax.random.normal(ks[2], (planes,), jnp.float32)
        self.w2 = conv_w(ks[3], planes, planes, 3)
        self.g2 = 1.0 + 0.1 * jax.random.normal(ks[4], (planes,), jnp.float32)
        self.b2 = 0.1 * jax.random.normal(ks[5], (planes,), jnp.float32)
        self.has_proj = (stride != 1) or (in_planes != self.expansion * planes)
        if self.has_proj:
            self.ws = conv_w(ks[6], self.expansion * planes, in_planes, 1)
            self.gs = 1.0 + 0.1 * jax.random.normal(ks[7], (planes,), jnp.float32)
            self.bs = 0.1 * jax.random.normal(ks[8], (planes,), jnp.float32)

    def __call__(self, x_nchw):
        planes = self.planes
        s = self.stride
        cp = _round_up(planes, _LANE)                         # lane-dense channels

        x = jnp.transpose(x_nchw, (0, 2, 3, 1)).astype(jnp.float32)   # NHWC f32
        x_bf = x.astype(jnp.bfloat16)                                  # MXU inputs
        n, h, w, cin = x.shape
        ho = (h + 2 - 3) // s + 1
        wo = (w + 2 - 3) // s + 1
        m = n * ho * wo

        g1 = _pad_vec(self.g1, cp); b1 = _pad_vec(self.b1, cp)
        g2 = _pad_vec(self.g2, cp); b2 = _pad_vec(self.b2, cp)

        # ---- conv1 + bn1 + relu ----
        if s == 1:
            y1, s1, q1 = _conv3x3_s1(x_bf, self.w1, cp)
        else:
            # TODO(synk): stride>1 3x3 conv still materializes an im2col patch
            # matrix (2.25x at stride 2); a phase-decomposed direct kernel
            # would remove that HBM expansion as well.
            p1 = _im2col(x_bf, 3, s, 1)
            y1, s1, q1 = matmul_bn_stats(p1, _w_mat(self.w1, cp))
        o1 = bn_finalize(y1, s1, q1, g1, b1, m, apply_relu=True)   # (M, Cp) f32

        # ---- shortcut ----
        if self.has_proj:
            ps = x_bf[:, ::s, ::s, :].reshape(m, cin)               # 1x1 conv patches
            ys, ss, qs = matmul_bn_stats(ps, _w_mat(self.ws, cp))
            gs = _pad_vec(self.gs, cp); bs = _pad_vec(self.bs, cp)
            sc = bn_finalize(ys, ss, qs, gs, bs, m, apply_relu=False)
        else:
            sc = jnp.pad(x.reshape(m, cin), ((0, 0), (0, cp - cin)))

        # ---- conv2 + bn2 + residual add + relu ----
        o1_nhwc = o1.reshape(n, ho, wo, cp)[..., :planes].astype(jnp.bfloat16)
        y2, s2, q2 = _conv3x3_s1(o1_nhwc, self.w2, cp)
        res = bn_finalize(y2, s2, q2, g2, b2, m, apply_relu=True,
                          residual=sc, emit_preact=self.is_last)

        def to_nchw(v2d):
            return jnp.transpose(v2d[:, :planes].reshape(n, ho, wo, planes),
                                 (0, 3, 1, 2))

        if self.is_last:
            out2d, pre2d = res
            return to_nchw(out2d), to_nchw(pre2d)
        return to_nchw(res)


# --------------------------- pure-JAX reference ----------------------------- #

def _ref_forward(blk, x, conv_dtype=jnp.bfloat16):
    """Reference forward. conv_dtype=bf16 mirrors the kernel's MXU precision."""
    def conv(x, w, stride, pad):
        return jax.lax.conv_general_dilated(
            x.astype(conv_dtype), w.astype(conv_dtype),
            (stride, stride), ((pad, pad), (pad, pad)),
            dimension_numbers=('NCHW', 'OIHW', 'NCHW'),
            preferred_element_type=jnp.float32)

    def bn(y, g, b):  # training-mode BN (batch stats, biased variance)
        mu = jnp.mean(y, axis=(0, 2, 3), keepdims=True)
        v = jnp.mean(jnp.square(y - mu), axis=(0, 2, 3), keepdims=True)
        return ((y - mu) / jnp.sqrt(v + _EPS)) * g.reshape(1, -1, 1, 1) \
            + b.reshape(1, -1, 1, 1)

    out = jax.nn.relu(bn(conv(x, blk.w1, blk.stride, 1), blk.g1, blk.b1))
    out = bn(conv(out, blk.w2, 1, 1), blk.g2, blk.b2)
    sc = bn(conv(x, blk.ws, blk.stride, 0), blk.gs, blk.bs) if blk.has_proj else x
    preact = out + sc
    out = jax.nn.relu(preact)
    return (out, preact) if blk.is_last else out


# ---------------------------------- main ------------------------------------ #

if __name__ == "__main__":
    key = jax.random.PRNGKey(0)
    kx, k1, k2 = jax.random.split(key, 3)
    x = jax.random.normal(kx, (2, 4, 16, 16), jnp.float32)   # NCHW, like PyTorch

    # block with projection shortcut (stride=2, channel change)
    blk1 = BasicBlockPallas(4, 8, stride=2, is_last=False, key=k1)
    y1 = blk1(x)
    jax.block_until_ready(y1)
    assert y1.shape == (2, 8, 8, 8)
    r1 = _ref_forward(blk1, x)                                # bf16-conv reference
    r1_f32 = _ref_forward(blk1, x, conv_dtype=jnp.float32)    # f32 sanity check
    assert jnp.allclose(y1, r1, atol=1e-2, rtol=1e-2)
    assert jnp.allclose(y1, r1_f32, atol=1e-1, rtol=1e-1)

    # block with identity shortcut + is_last=True (returns (out, preact))
    blk2 = BasicBlockPallas(8, 8, stride=1, is_last=True, key=k2)
    y2_out, y2_pre = blk2(y1)
    jax.block_until_ready((y2_out, y2_pre))
    assert y2_out.shape == (2, 8, 8, 8) and y2_pre.shape == (2, 8, 8, 8)
    r2_out, r2_pre = _ref_forward(blk2, y1)
    assert jnp.allclose(y2_out, r2_out, atol=1e-2, rtol=1e-2)
    assert jnp.allclose(y2_pre, r2_pre, atol=1e-2, rtol=1e-2)

    print("KERNEL_OK")
</pallas_src>

<mosaic_0001>
module attributes {stable_mosaic.version = 11 : i64} {
  func.func @_matmul_stats_kernel(%arg0: i32, %arg1: memref<64x36xbf16, #tpu.memory_space<vmem>>, %arg2: memref<36x128xbf16, #tpu.memory_space<vmem>>, %arg3: memref<64x128xf32, #tpu.memory_space<vmem>>, %arg4: memref<1x128xf32, #tpu.memory_space<vmem>>, %arg5: memref<1x128xf32, #tpu.memory_space<vmem>>, %arg6: memref<1x128xf32, #tpu.memory_space<vmem>>, %arg7: memref<1x128xf32, #tpu.memory_space<vmem>>) attributes {dimension_semantics = [#tpu.dimension_semantics<arbitrary>], iteration_bounds = array<i64: 2>, scalar_prefetch = 0 : i64, scratch_operands = 2 : i64, tpu.core_type = #tpu.core_type<tc>, window_params = [{transform_indices = @transform_0, window_bounds = array<i64: 64, 36>}, {pipeline_mode = #tpu.pipeline_mode<synchronous>, transform_indices = @transform_1, window_bounds = array<i64: 36, 128>}, {transform_indices = @transform_2, window_bounds = array<i64: 64, 128>}, {pipeline_mode = #tpu.pipeline_mode<synchronous>, transform_indices = @transform_3, window_bounds = array<i64: 1, 128>}, {pipeline_mode = #tpu.pipeline_mode<synchronous>, transform_indices = @transform_4, window_bounds = array<i64: 1, 128>}]} {
    %c0 = arith.constant 0 : index
    %c0_0 = arith.constant 0 : index
    %0 = vector.load %arg1[%c0, %c0_0] : memref<64x36xbf16, #tpu.memory_space<vmem>>, vector<64x36xbf16>
    %c0_1 = arith.constant 0 : index
    %c0_2 = arith.constant 0 : index
    %1 = vector.load %arg2[%c0_1, %c0_2] : memref<36x128xbf16, #tpu.memory_space<vmem>>, vector<36x128xbf16>
    %cst = arith.constant dense<0.000000e+00> : vector<64x128xf32>
    %2 = tpu.matmul %0, %1, %cst {dimension_numbers = #tpu.dot_dimension_numbers<[1], [0], [0], [1], [0, 0, 1, 1], [], []>} : vector<64x36xbf16>, vector<36x128xbf16>, vector<64x128xf32> -> vector<64x128xf32>
    %c0_3 = arith.constant 0 : index
    %c0_4 = arith.constant 0 : index
    %3 = vector.load %arg3[%c0_3, %c0_4] : memref<64x128xf32, #tpu.memory_space<vmem>>, vector<64x128xf32>
    tpu.vector_store %arg3[%c0_3, %c0_4], %2 {strides = array<i32>} : memref<64x128xf32, #tpu.memory_space<vmem>>, vector<64x128xf32>,
    %c0_i32 = arith.constant 0 : i32
    %4 = arith.cmpi eq, %arg0, %c0_i32 : i32
    %5 = arith.extui %4 : i1 to i32
    %c0_i32_5 = arith.constant 0 : i32
    %6 = arith.cmpi ne, %5, %c0_i32_5 : i32
    scf.if %6 {
      %cst_17 = arith.constant 0.000000e+00 : f32
      %21 = vector.broadcast %cst_17 : f32 to vector<1x128xf32>
      %c0_18 = arith.constant 0 : index
      %c0_19 = arith.constant 0 : index
      %22 = vector.load %arg6[%c0_18, %c0_19] : memref<1x128xf32, #tpu.memory_space<vmem>>, vector<1x128xf32>
      tpu.vector_store %arg6[%c0_18, %c0_19], %21 {strides = array<i32>} : memref<1x128xf32, #tpu.memory_space<vmem>>, vector<1x128xf32>,
      %cst_20 = arith.constant 0.000000e+00 : f32
      %23 = vector.broadcast %cst_20 : f32 to vector<1x128xf32>
      %c0_21 = arith.constant 0 : index
      %c0_22 = arith.constant 0 : index
      %24 = vector.load %arg7[%c0_21, %c0_22] : memref<1x128xf32, #tpu.memory_space<vmem>>, vector<1x128xf32>
      tpu.vector_store %arg7[%c0_21, %c0_22], %23 {strides = array<i32>} : memref<1x128xf32, #tpu.memory_space<vmem>>, vector<1x128xf32>,
    } else {
    }
    %c0_6 = arith.constant 0 : index
    %c0_7 = arith.constant 0 : index
    %7 = vector.load %arg6[%c0_6, %c0_7] : memref<1x128xf32, #tpu.memory_space<vmem>>, vector<1x128xf32>
    %cst_8 = arith.constant dense<0.000000e+00> : vector<128xf32>
    %8 = vector.multi_reduction <add>, %2, %cst_8 [0] : vector<64x128xf32> to vector<128xf32>
    %9 = vector.shape_cast %8 : vector<128xf32> to vector<1x128xf32>
    %10 = arith.addf %7, %9 : vector<1x128xf32>
    %c0_9 = arith.constant 0 : index
    %c0_10 = arith.constant 0 : index
    %11 = vector.load %arg6[%c0_9, %c0_10] : memref<1x128xf32, #tpu.memory_space<vmem>>, vector<1x128xf32>
    tpu.vector_store %arg6[%c0_9, %c0_10], %10 {strides = array<i32>} : memref<1x128xf32, #tpu.memory_space<vmem>>, vector<1x128xf32>,
    %c0_11 = arith.constant 0 : index
    %c0_12 = arith.constant 0 : index
    %12 = vector.load %arg7[%c0_11, %c0_12] : memref<1x128xf32, #tpu.memory_space<vmem>>, vector<1x128xf32>
    %13 = arith.mulf %2, %2 : vector<64x128xf32>
    %cst_13 = arith.constant dense<0.000000e+00> : vector<128xf32>
    %14 = vector.multi_reduction <add>, %13, %cst_13 [0] : vector<64x128xf32> to vector<128xf32>
    %15 = vector.shape_cast %14 : vector<128xf32> to vector<1x128xf32>
    %16 = arith.addf %12, %15 : vector<1x128xf32>
    %c0_14 = arith.constant 0 : index
    %c0_15 = arith.constant 0 : index
    %17 = vector.load %arg7[%c0_14, %c0_15] : memref<1x128xf32, #tpu.memory_space<vmem>>, vector<1x128xf32>
    tpu.vector_store %arg7[%c0_14, %c0_15], %16 {strides = array<i32>} : memref<1x128xf32, #tpu.memory_space<vmem>>, vector<1x128xf32>,
    %c1_i32 = arith.constant 1 : i32
    %18 = arith.cmpi eq, %arg0, %c1_i32 : i32
    %19 = arith.extui %18 : i1 to i32
    %c0_i32_16 = arith.constant 0 : i32
    %20 = arith.cmpi ne, %19, %c0_i32_16 : i32
    scf.if %20 {
      %c0_17 = arith.constant 0 : index
      %c0_18 = arith.constant 0 : index
      %21 = vector.load %arg6[%c0_17, %c0_18] : memref<1x128xf32, #tpu.memory_space<vmem>>, vector<1x128xf32>
      %c0_19 = arith.constant 0 : index
      %c0_20 = arith.constant 0 : index
      %22 = vector.load %arg4[%c0_19, %c0_20] : memref<1x128xf32, #tpu.memory_space<vmem>>, vector<1x128xf32>
      tpu.vector_store %arg4[%c0_19, %c0_20], %21 {strides = array<i32>} : memref<1x128xf32, #tpu.memory_space<vmem>>, vector<1x128xf32>,
      %c0_21 = arith.constant 0 : index
      %c0_22 = arith.constant 0 : index
      %23 = vector.load %arg7[%c0_21, %c0_22] : memref<1x128xf32, #tpu.memory_space<vmem>>, vector<1x128xf32>
      %c0_23 = arith.constant 0 : index
      %c0_24 = arith.constant 0 : index
      %24 = vector.load %arg5[%c0_23, %c0_24] : memref<1x128xf32, #tpu.memory_space<vmem>>, vector<1x128xf32>
      tpu.vector_store %arg5[%c0_23, %c0_24], %23 {strides = array<i32>} : memref<1x128xf32, #tpu.memory_space<vmem>>, vector<1x128xf32>,
    } else {
    }
    return
  }
  func.func @transform_0(%arg0: i32) -> (i32, i32) {
    %c0_i32 = arith.constant 0 : i32
    %c0_i32_0 = arith.constant 0 : i32
    return %arg0, %c0_i32 : i32, i32
  }
  func.func @transform_1(%arg0: i32) -> (i32, i32) {
    %c0_i32 = arith.constant 0 : i32
    %c0_i32_0 = arith.constant 0 : i32
    %c0_i32_1 = arith.constant 0 : i32
    return %c0_i32, %c0_i32_0 : i32, i32
  }
  func.func @transform_2(%arg0: i32) -> (i32, i32) {
    %c0_i32 = arith.constant 0 : i32
    %c0_i32_0 = arith.constant 0 : i32
    return %arg0, %c0_i32 : i32, i32
  }
  func.func @transform_3(%arg0: i32) -> (i32, i32) {
    %c0_i32 = arith.constant 0 : i32
    %c0_i32_0 = arith.constant 0 : i32
    %c0_i32_1 = arith.constant 0 : i32
    return %c0_i32, %c0_i32_0 : i32, i32
  }
  func.func @transform_4(%arg0: i32) -> (i32, i32) {
    %c0_i32 = arith.constant 0 : i32
    %c0_i32_0 = arith.constant 0 : i32
    %c0_i32_1 = arith.constant 0 : i32
    return %c0_i32, %c0_i32_0 : i32, i32
  }
}

</mosaic_0001>

<llo_original>
// kernel: tpu_custom_call.1
$region0: #{tpu_custom_call.1}
  #allocation0 [shape = 'u32[]', space=smem, size = 0x4, offset = 0x4, fixed_abs, tag = 'smem constant byte address 0x4 - core index']
  #allocation1 [shape = 'u32[72,128]{1,0:T(1,128)}', space=vmem, size = 0x9000, scoped, tag = 'internal scratch']
  #allocation2 [shape = 'f32[1,128]{1,0:T(1,128)}', space=vmem, size = 0x200, scoped, tag = 'scratch operand']
  #allocation3 [shape = 'f32[1,128]{1,0:T(1,128)}', space=vmem, size = 0x200, scoped, tag = 'scratch operand']
  %s0 = inlined_call_operand.vmem [shape: bf16[128,36], index: 0, kind: input, shape index: {}]
  %s1 = inlined_call_operand.vmem [shape: bf16[36,128], index: 1, kind: input, shape index: {}]
  %s2 = inlined_call_operand.hbm [shape: f32[128,128], index: 2, kind: output, shape index: {0}]
  %s3 = inlined_call_operand.hbm [shape: f32[1,128], index: 3, kind: output, shape index: {1}]
  %s4 = inlined_call_operand.hbm [shape: f32[1,128], index: 4, kind: output, shape index: {2}]
  %5 = xla_tuple %s2, %s3, %s4
  %s6 = sld [smem:[#allocation0]]
  $region65: #{tpu_custom_call.1} parent=0
    _
  %s8 = ssub.s32 1, %s6
  %s9 = scalar_select 0, %s8, %s6
  $region1: #{tpu_custom_call.1} parent=0
    #allocation4 [shape = 'u8[65536]{0}', space=vmem, size = 0x10000, scoped, tag = 'output window, operand 0']
    #allocation5 [shape = 's32[2]{0}', space=sflag, size = 0x8, scoped, tag = 'scoped memory for tpu_custom_call.1']
    #allocation6 [shape = 'u8[512]{0}', space=vmem, size = 0x400, scoped, tag = 'output window, operand 1, single buffered']
    #allocation7 [shape = 's32[1]{0}', space=sflag, size = 0x4, scoped, tag = 'scoped memory for tpu_custom_call.1']
    #allocation8 [shape = 'u8[512]{0}', space=vmem, size = 0x400, scoped, tag = 'output window, operand 2, single buffered']
    %10 = vsyncpa [#allocation5], 0
    %s11 = scalar_lea.sflag [#allocation5], 1
    %12 = vsyncpa %s11, 0
    %13 = vsyncpa [#allocation7], 0
    loop: start=0, step=1, limit=4
    $region2: #{tpu_custom_call.1} parent=1 // loop_pre_header
      _
    $region3: #{tpu_custom_call.1} parent=1 // loop_header
      %s15 = sphi 0, %s19
      %p16 = scmp.ge.s32.totalorder %s15, 4
      %s25 = sphi 0, %s27
      %s28 = sphi 0, %s25
      %s29 = sphi 0, %s28
      %s45 = sphi 0, %s29
      %s49 = sphi 0, %s49
      %s51 = sphi 0, %s49
      %s52 = sphi 0, %s51
      %s66 = sphi 0, %s52
      %s72 = sphi 0, %s74
      %s75 = sphi 0, %s72
      %s76 = sphi 0, %s75
      %s92 = sphi 0, %s76
      %s96 = sphi 0, %s96
      %s98 = sphi 0, %s96
      %s99 = sphi 0, %s98
      %s113 = sphi 0, %s99
      %s117 = sphi 0, %s117
      %s119 = sphi 0, %s117
      %s120 = sphi 0, %s119
      %s134 = sphi 0, %s120
    $region4: #{tpu_custom_call.1} parent=1 // loop_header_branch
      %18 = sbr.rel (%p16) target = $region8
    $region5: #{tpu_custom_call.1} parent=1 // loop_body
      %s20 = ssub.s32 %s15, 1
      %s21 = ssub.s32 %s15, 2
      %s22 = sadd.s32 %s15, 1
      %s23 = ssub.s32 %s15, %s22
      %p24 = scmp.eq.s32.totalorder %s23, 0
      %s26 = sadd.s32 %s25, 1
      %s27 = scalar_select %p24, %s25, %s26
      %p30 = pneg %p24
      %p31 = scmp.eq.s32.totalorder %s15, 1
      %p32 = por %p30, %p31
      %p33 = scmp.ne.s32.totalorder %s25, %s28
      %p34 = scmp.eq.s32.totalorder %s15, 0
      %p35 = por %p33, %p34
      %p36 = scmp.ne.s32.totalorder %s25, %s28
      %p37 = scmp.eq.s32.totalorder %s20, 1
      %p38 = por %p36, %p37
      %p39 = scmp.ne.s32.totalorder %s28, %s29
      %p40 = scmp.eq.s32.totalorder %s20, 0
      %p41 = por %p39, %p40
      %p42 = scmp.ne.s32.totalorder %s28, %s29
      %p43 = scmp.eq.s32.totalorder %s21, 1
      %p44 = por %p42, %p43
      %p46 = scmp.ne.s32.totalorder %s29, %s45
      %p47 = scmp.eq.s32.totalorder %s21, 0
      %p48 = por %p46, %p47
      %s50 = sadd.s32 %s49, 1
      %p53 = scmp.eq.s32.totalorder %s15, 1
      %p54 = scmp.ne.s32.totalorder %s49, %s51
      %p55 = scmp.eq.s32.totalorder %s15, 0
      %p56 = por %p54, %p55
      %p57 = scmp.ne.s32.totalorder %s49, %s51
      %p58 = scmp.eq.s32.totalorder %s20, 1
      %p59 = por %p57, %p58
      %p60 = scmp.ne.s32.totalorder %s51, %s52
      %p61 = scmp.eq.s32.totalorder %s20, 0
      %p62 = por %p60, %p61
      %p63 = scmp.ne.s32.totalorder %s51, %s52
      %p64 = scmp.eq.s32.totalorder %s21, 1
      %p65 = por %p63, %p64
      %p67 = scmp.ne.s32.totalorder %s52, %s66
      %p68 = scmp.eq.s32.totalorder %s21, 0
      %p69 = por %p67, %p68
      %s70 = ssub.s32 %s15, %s22
      %p71 = scmp.eq.s32.totalorder %s70, 0
      %s73 = sadd.s32 %s72, 1
      %s74 = scalar_select %p71, %s72, %s73
      %p77 = pneg %p71
      %p78 = scmp.eq.s32.totalorder %s15, 1
      %p79 = por %p77, %p78
      %p80 = scmp.ne.s32.totalorder %s72, %s75
      %p81 = scmp.eq.s32.totalorder %s15, 0
      %p82 = por %p80, %p81
      %p83 = scmp.ne.s32.totalorder %s72, %s75
      %p84 = scmp.eq.s32.totalorder %s20, 1
      %p85 = por %p83, %p84
      %p86 = scmp.ne.s32.totalorder %s75, %s76
      %p87 = scmp.eq.s32.totalorder %s20, 0
      %p88 = por %p86, %p87
      %p89 = scmp.ne.s32.totalorder %s75, %s76
      %p90 = scmp.eq.s32.totalorder %s21, 1
      %p91 = por %p89, %p90
      %p93 = scmp.ne.s32.totalorder %s76, %s92
      %p94 = scmp.eq.s32.totalorder %s21, 0
      %p95 = por %p93, %p94
      %s97 = sadd.s32 %s96, 1
      %p100 = scmp.eq.s32.totalorder %s15, 1
      %p101 = scmp.ne.s32.totalorder %s96, %s98
      %p102 = scmp.eq.s32.totalorder %s15, 0
      %p103 = por %p101, %p102
      %p104 = scmp.ne.s32.totalorder %s96, %s98
      %p105 = scmp.eq.s32.totalorder %s20, 1
      %p106 = por %p104, %p105
      %p107 = scmp.ne.s32.totalorder %s98, %s99
      %p108 = scmp.eq.s32.totalorder %s20, 0
      %p109 = por %p107, %p108
      %p110 = scmp.ne.s32.totalorder %s98, %s99
      %p111 = scmp.eq.s32.totalorder %s21, 1
      %p112 = por %p110, %p111
      %p114 = scmp.ne.s32.totalorder %s99, %s113
      %p115 = scmp.eq.s32.totalorder %s21, 0
      %p116 = por %p114, %p115
      %s118 = sadd.s32 %s117, 1
      %p121 = scmp.eq.s32.totalorder %s15, 1
      %p122 = scmp.ne.s32.totalorder %s117, %s119
      %p123 = scmp.eq.s32.totalorder %s15, 0
      %p124 = por %p122, %p123
      %p125 = scmp.ne.s32.totalorder %s117, %s119
      %p126 = scmp.eq.s32.totalorder %s20, 1
      %p127 = por %p125, %p126
      %p128 = scmp.ne.s32.totalorder %s119, %s120
      %p129 = scmp.eq.s32.totalorder %s20, 0
      %p130 = por %p128, %p129
      %p131 = scmp.ne.s32.totalorder %s119, %s120
      %p132 = scmp.eq.s32.totalorder %s21, 1
      %p133 = por %p131, %p132
      %p135 = scmp.ne.s32.totalorder %s120, %s134
      %p136 = scmp.eq.s32.totalorder %s21, 0
      %p137 = por %p135, %p136
      %p138 = scmp.le.s32.totalorder 1, %s15
      %p139 = scmp.lt.s32.totalorder %s15, 3
      %p140 = pnand %p138, %p139
      %p141 = pneg %p140
      // Predicated region
      $region9: #{tpu_custom_call.1} parent=5 // pred_check
        _
      $region10: #{tpu_custom_call.1} parent=5 // pred_check_branch
        %143 = sbr.rel (%p140) target = $region12
      $region11: #{tpu_custom_call.1} parent=5 // pred_region
        %s144 = ssub.s32 %s15, 1
        // Predicated region
        $region13: #{tpu_custom_call.1} parent=11 // pred_check
          %p145 = pneg %p62
        $region14: #{tpu_custom_call.1} parent=11 // pred_check_branch
          %147 = sbr.rel (%p145) target = $region16
        $region15: #{tpu_custom_call.1} parent=11 // pred_region
          _
        $region16: #{tpu_custom_call.1} parent=11 // pred_fallthru
          _
      $region12: #{tpu_custom_call.1} parent=5 // pred_fallthru
        _
      %p148 = scmp.lt.s32.totalorder %s15, 2
      // Predicated region
      $region17: #{tpu_custom_call.1} parent=5 // pred_check
        %p149 = pneg %p148
      $region18: #{tpu_custom_call.1} parent=5 // pred_check_branch
        %151 = sbr.rel (%p149) target = $region20
      $region19: #{tpu_custom_call.1} parent=5 // pred_region
        // Predicated region
        $region21: #{tpu_custom_call.1} parent=19 // pred_check
          %p152 = pneg %p35
        $region22: #{tpu_custom_call.1} parent=19 // pred_check_branch
          %154 = sbr.rel (%p152) target = $region24
        $region23: #{tpu_custom_call.1} parent=19 // pred_region
          %s155 = smul.u32 8, %s15
          %p156 = scmp.lt.s32.totalorder %s155, 15
          %s157 = scalar_select %p156, %s155, 15
          %s158 = smul.addr %s157, 4
          %s159 = scalar_lea.vmem %s0, %s158
          %s160 = smul.u32 8, %s15
        $region24: #{tpu_custom_call.1} parent=19 // pred_fallthru
          _
      $region20: #{tpu_custom_call.1} parent=5 // pred_fallthru
        _
      %p161 = scmp.le.s32.totalorder 1, %s15
      %p162 = scmp.lt.s32.totalorder %s15, 3
      %p163 = pnand %p161, %p162
      %p164 = pneg %p163
      // Predicated region
      $region25: #{tpu_custom_call.1} parent=5 // pred_check
        _
      $region26: #{tpu_custom_call.1} parent=5 // pred_check_branch
        %166 = sbr.rel (%p163) target = $region28
      $region27: #{tpu_custom_call.1} parent=5 // pred_region
        %s167 = ssub.s32 %s15, 1
        %s168 = smul.u32 8, %s20
        %p169 = scmp.lt.s32.totalorder %s168, 15
        %s170 = scalar_select %p169, %s168, 15
        %s171 = smul.addr %s170, 4
        %s172 = scalar_lea.vmem %s0, %s171
        %p173 = pneg %p41
        %p174 = pneg %p38
        %p175 = pneg %p62
        %p176 = pneg %p59
        %p177 = pneg %p88
        %p178 = pneg %p85
        %s179 = sand.u32 %s75, 1
        %s180 = scalar_lea.sflag [#allocation5], %s179
        %s181 = sand.u32 %s75, 1
        %s182 = smul.addr %s181, 64
        %s183 = scalar_lea.vmem [#allocation4], %s182
        %p184 = pneg %p109
        %p185 = pneg %p106
        %p186 = pneg %p130
        %p187 = pneg %p127
        %s188 = smul.u32 8, %s20
        %p189 = scmp.lt.s32.totalorder %s188, 15
        %s190 = scalar_select %p189, %s188, 15
        %s191 = smul.addr %s190, 4
        %s192 = scalar_lea.vmem %s0, %s191
        %s193 = smul.u32 8, %s20
        %s194 = smul.u32 8, %s20
        %v196 = vld [vmem:[%s192] sm:$0xf]
        %v197 = vld [vmem:[%s192 + $0x4] sm:$0xf]
        %v198 = vld [vmem:[%s192 + $0x8] sm:$0xf]
        %v199 = vld [vmem:[%s192 + $0xc] sm:$0xf]
        %v200 = vld [vmem:[%s192 + $0x10] sm:$0xf]
        %v201 = vld [vmem:[%s192 + $0x14] sm:$0xf]
        %v202 = vld [vmem:[%s192 + $0x18] sm:$0xf]
        %v203 = vld [vmem:[%s192 + $0x1c] sm:$0xf]
        %v204 = vld [vmem:[%s1] sm:$0xf]
        %v205 = vld [vmem:[%s1 + $0x4] sm:$0xf]
        %v206 = vld [vmem:[%s1 + $0x8] sm:$0xf]
        %v207 = vld [vmem:[%s1 + $0xc] sm:$0xf]
        %v208 = vld [vmem:[%s1 + $0x10] sm:$0x3]
        %v217 = vunpack.c.l.b16 %v196
        %v218 = vunpack.c.l.b16 %v197
        %v219 = vunpack.c.l.b16 %v198
        %v220 = vunpack.c.l.b16 %v199
        %v221 = vunpack.c.l.b16 %v200
        %v222 = vunpack.c.l.b16 %v201
        %v223 = vunpack.c.l.b16 %v202
        %v224 = vunpack.c.l.b16 %v203
        %v225 = vpack.c.b16 %v218, %v217
        %v226 = vpack.c.b16 %v220, %v219
        %v227 = vpack.c.b16 %v222, %v221
        %v228 = vpack.c.b16 %v224, %v223
        %v234 = vunpack.c.l.b16 %v204
        %v235 = vunpack.c.l.b16 %v205
        %v236 = vunpack.c.l.b16 %v206
        %v237 = vunpack.c.l.b16 %v207
        %v238 = vunpack.c.l.b16 %v208
        %v239 = vpack.c.b16 %v235, %v234
        %v240 = vpack.c.b16 %v237, %v236
        %v241 = vpack.c.b16 %v238, %v238
        %vm244 = vcmask 293888
        %v246 = vsel %vm244, %v225, 0
        %v249 = vsel %vm244, %v226, 0
        %v252 = vsel %vm244, %v227, 0
        %v255 = vsel %vm244, %v228, 0
        %vm257 = vcmask 1041408
        %v259 = vsel %vm257, %v241, 0
        %261 = vmatpush.bf16.msra.mxu0 0
        %262 = vmatpush.bf16.msra.mxu0 0
        %263 = vmatpush.bf16.msra.mxu0 0
        %264 = vmatpush.bf16.msra.mxu0 0
        %265 = vmatpush.bf16.msra.mxu0 0
        %266 = vmatpush.bf16.msra.mxu0 %v259
        %267 = vmatpush.bf16.msra.mxu0 %v240
        %268 = vmatpush.bf16.msra.mxu0 %v239
        %269 = vmatmul.bf16.gmra.mxu0 %v246
        %v270 = vpop.f32.mrf.mxu0
        %v271 = vadd.f32 0.0, %v270
        %v272 = vpop.f32.mrf.mxu0
        %v273 = vadd.f32 0.0, %v272
        %274 = vmatmul.bf16.gmra.mxu0 %v249
        %v275 = vpop.f32.mrf.mxu0
        %v276 = vadd.f32 0.0, %v275
        %v277 = vpop.f32.mrf.mxu0
        %v278 = vadd.f32 0.0, %v277
        %279 = vmatmul.bf16.gmra.mxu0 %v252
        %v280 = vpop.f32.mrf.mxu0
        %v281 = vadd.f32 0.0, %v280
        %v282 = vpop.f32.mrf.mxu0
        %v283 = vadd.f32 0.0, %v282
        %284 = vmatmul.bf16.gmra.mxu0 %v255
        %v285 = vpop.f32.mrf.mxu0
        %v286 = vadd.f32 0.0, %v285
        %v287 = vpop.f32.mrf.mxu0
        %v288 = vadd.f32 0.0, %v287
        %289 = vdwg.mxu0
        %290 = vst [vmem:[%s183] sm:$0xff] %v271
        %291 = vst [vmem:[%s183 + $0x8] sm:$0xff] %v273
        %292 = vst [vmem:[%s183 + $0x10] sm:$0xff] %v276
        %293 = vst [vmem:[%s183 + $0x18] sm:$0xff] %v278
        %294 = vst [vmem:[%s183 + $0x20] sm:$0xff] %v281
        %295 = vst [vmem:[%s183 + $0x28] sm:$0xff] %v283
        %296 = vst [vmem:[%s183 + $0x30] sm:$0xff] %v286
        %297 = vst [vmem:[%s183 + $0x38] sm:$0xff] %v288
        %p298 = scmp.eq.s32.totalorder %s20, 0
        // Predicated region
        $region29: #{tpu_custom_call.1} parent=27 // pred_check
          %p299 = pneg %p298
        $region30: #{tpu_custom_call.1} parent=27 // pred_check_branch
          %301 = sbr.rel (%p299) target = $region32
        $region31: #{tpu_custom_call.1} parent=27 // pred_region
          %302 = vst [vmem:[#allocation2] sm:$0x1] 0.0
          %303 = vst [vmem:[#allocation3] sm:$0x1] 0.0
        $region32: #{tpu_custom_call.1} parent=27 // pred_fallthru
          _
        %v304 = vld [vmem:[#allocation2] sm:$0x1]
        %v305 = vadd.f32 %v271, %v273
        %v306 = vadd.f32 %v305, %v276
        %v307 = vadd.f32 %v306, %v278
        %v308 = vadd.f32 %v307, %v281
        %v309 = vadd.f32 %v308, %v283
        %v310 = vadd.f32 %v309, %v286
        %v311 = vadd.f32 %v310, %v288
        %v312 = vrot.slane %v311, 4
        %v313 = vadd.f32 %v311, %v312
        %v314 = vrot.slane %v313, 2
        %v315 = vadd.f32 %v313, %v314
        %v316 = vrot.slane %v315, 1
        %v317 = vadd.f32 %v315, %v316
        %v318 = vadd.f32 %v304, %v317
        %319 = vst [vmem:[#allocation2] sm:$0x1] %v318
        %v320 = vld [vmem:[#allocation3] sm:$0x1]
        %v321 = vmul.f32 %v271, %v271
        %v322 = vmul.f32 %v273, %v273
        %v323 = vmul.f32 %v276, %v276
        %v324 = vmul.f32 %v278, %v278
        %v325 = vmul.f32 %v281, %v281
        %v326 = vmul.f32 %v283, %v283
        %v327 = vmul.f32 %v286, %v286
        %v328 = vmul.f32 %v288, %v288
        %v329 = vadd.f32 %v321, %v322
        %v330 = vadd.f32 %v329, %v323
        %v331 = vadd.f32 %v330, %v324
        %v332 = vadd.f32 %v331, %v325
        %v333 = vadd.f32 %v332, %v326
        %v334 = vadd.f32 %v333, %v327
        %v335 = vadd.f32 %v334, %v328
        %v336 = vrot.slane %v335, 4
        %v337 = vadd.f32 %v335, %v336
        %v338 = vrot.slane %v337, 2
        %v339 = vadd.f32 %v337, %v338
        %v340 = vrot.slane %v339, 1
        %v341 = vadd.f32 %v339, %v340
        %v342 = vadd.f32 %v320, %v341
        %343 = vst [vmem:[#allocation3] sm:$0x1] %v342
        %p344 = scmp.eq.s32.totalorder %s20, 1
        // Predicated region
        $region33: #{tpu_custom_call.1} parent=27 // pred_check
          %p345 = pneg %p344
        $region34: #{tpu_custom_call.1} parent=27 // pred_check_branch
          %347 = sbr.rel (%p345) target = $region36
        $region35: #{tpu_custom_call.1} parent=27 // pred_region
          %v348 = vld [vmem:[#allocation2] sm:$0x1]
          %349 = vst [vmem:[#allocation6] sm:$0x1] %v348
          %v350 = vld [vmem:[#allocation3] sm:$0x1]
          %351 = vst [vmem:[#allocation8] sm:$0x1] %v350
        $region36: #{tpu_custom_call.1} parent=27 // pred_fallthru
          _
        %s352 = sand.u32 %s75, 1
        %s353 = scalar_lea.sflag [#allocation5], %s352
        %s354 = sand.u32 %s75, 1
        %s355 = smul.addr %s354, 64
        %s356 = scalar_lea.vmem [#allocation4], %s355
        // Predicated region
        $region37: #{tpu_custom_call.1} parent=27 // pred_check
          %p357 = pneg %p85
        $region38: #{tpu_custom_call.1} parent=27 // pred_check_branch
          %359 = sbr.rel (%p357) target = $region40
        $region39: #{tpu_custom_call.1} parent=27 // pred_region
          %s360 = smul.u32 8, %s20
          %362 = vsyncadd %s353, 0
          %s363 = smul.addr %s360, 8
          %s364 = scalar_lea.hbm %s2, %s363
          %s365 = sshll.u32 %s356, 4
          %s366 = int_to_ptr.vmem [resolvable:$true] %s365
          %s367 = sshll.u32 %s364, 4
          %s368 = int_to_ptr.hbm [resolvable:$true] %s367
          %373 = dma.vmem_to_hbm [thread:$0]  %s366, 1024, %s368, %s353, 128, 128, 8
        $region40: #{tpu_custom_call.1} parent=27 // pred_fallthru
          _
        // Predicated region
        $region41: #{tpu_custom_call.1} parent=27 // pred_check
          %p374 = pneg %p106
        $region42: #{tpu_custom_call.1} parent=27 // pred_check_branch
          %376 = sbr.rel (%p374) target = $region44
        $region43: #{tpu_custom_call.1} parent=27 // pred_region
          %378 = vsyncadd [#allocation7], 0
          %s380 = sshll.u32 [#allocation6], 4
          %s381 = int_to_ptr.vmem [resolvable:$true] %s380
          %s382 = sshll.u32 %s3, 4
          %s383 = int_to_ptr.hbm [resolvable:$true] %s382
          %385 = dma.vmem_to_hbm [thread:$0]  %s381, 16, %s383, [#allocation7]
        $region44: #{tpu_custom_call.1} parent=27 // pred_fallthru
          _
        // Predicated region
        $region45: #{tpu_custom_call.1} parent=27 // pred_check
          %p386 = pneg %p127
        $region46: #{tpu_custom_call.1} parent=27 // pred_check_branch
          %388 = sbr.rel (%p386) target = $region48
        $region47: #{tpu_custom_call.1} parent=27 // pred_region
          %390 = vsyncadd [#allocation7], 0
          %s392 = sshll.u32 [#allocation8], 4
          %s393 = int_to_ptr.vmem [resolvable:$true] %s392
          %s394 = sshll.u32 %s4, 4
          %s395 = int_to_ptr.hbm [resolvable:$true] %s394
          %397 = dma.vmem_to_hbm [thread:$0]  %s393, 16, %s395, [#allocation7]
        $region48: #{tpu_custom_call.1} parent=27 // pred_fallthru
          _
        // Predicated region
        $region49: #{tpu_custom_call.1} parent=27 // pred_check
          %p398 = pneg %p106
        $region50: #{tpu_custom_call.1} parent=27 // pred_check_branch
          %400 = sbr.rel (%p398) target = $region52
        $region51: #{tpu_custom_call.1} parent=27 // pred_region
          %402 = dma.done [#allocation7], 16
        $region52: #{tpu_custom_call.1} parent=27 // pred_fallthru
          _
        // Predicated region
        $region53: #{tpu_custom_call.1} parent=27 // pred_check
          %p403 = pneg %p127
        $region54: #{tpu_custom_call.1} parent=27 // pred_check_branch
          %405 = sbr.rel (%p403) target = $region56
        $region55: #{tpu_custom_call.1} parent=27 // pred_region
          %407 = dma.done [#allocation7], 16
        $region56: #{tpu_custom_call.1} parent=27 // pred_fallthru
          _
      $region28: #{tpu_custom_call.1} parent=5 // pred_fallthru
        _
      %p408 = scmp.le.s32.totalorder 2, %s15
      // Predicated region
      $region57: #{tpu_custom_call.1} parent=5 // pred_check
        %p409 = pneg %p408
      $region58: #{tpu_custom_call.1} parent=5 // pred_check_branch
        %411 = sbr.rel (%p409) target = $region60
      $region59: #{tpu_custom_call.1} parent=5 // pred_region
        %s412 = ssub.s32 %s15, 2
        // Predicated region
        $region61: #{tpu_custom_call.1} parent=59 // pred_check
          %p413 = pneg %p91
        $region62: #{tpu_custom_call.1} parent=59 // pred_check_branch
          %415 = sbr.rel (%p413) target = $region64
        $region63: #{tpu_custom_call.1} parent=59 // pred_region
          %s416 = sand.u32 %s76, 1
          %s417 = scalar_lea.sflag [#allocation5], %s416
          %s418 = sand.u32 %s76, 1
          %s419 = smul.addr %s418, 64
          %s420 = scalar_lea.vmem [#allocation4], %s419
          %422 = dma.done %s417, 1024
        $region64: #{tpu_custom_call.1} parent=59 // pred_fallthru
          _
      $region60: #{tpu_custom_call.1} parent=5 // pred_fallthru
        _
    $region6: #{tpu_custom_call.1} parent=1 // loop_footer
      %s19 = sadd.s32 1, %s15
    $region7: #{tpu_custom_call.1} parent=1 // loop_footer_branch
      %14 = sbr.rel target = $region3
    $region8: #{tpu_custom_call.1} parent=1 // loop_exit
      _
    %423 = vsyncpa [#allocation5], 1
    %s424 = scalar_lea.sflag [#allocation5], 1
    %425 = vsyncpa %s424, 1
    %426 = vsyncpa [#allocation7], 1

</llo_original>
